<compile_context>
chip_gen: v5e
topology: v5e:2x2
jax: 0.10.0
libtpu: 0.0.40
codegen_flags: <defaults>
</compile_context>

<pallas_src>
import jax
import jax.numpy as jnp
from jax.experimental import pallas as pl
from jax.experimental.pallas import tpu as pltpu

EPS = 1e-5          # nn.BatchNorm2d default eps
NEG_SLOPE = 0.2     # nn.LeakyReLU(0.2)


# ---------------------------------------------------------------------------------------
# Kernels
# ---------------------------------------------------------------------------------------
def conv_stats_kernel(patches_ref, w_ref, conv_ref, sum_ref, ssq_ref):
    """One M-tile: conv = patches @ w on the MXU (bf16 in, f32 acc); store conv in bf16 and
    accumulate per-channel sum / sum-of-squares from the f32 result (resident accumulators)."""
    conv = jnp.dot(patches_ref[...], w_ref[...],
                   preferred_element_type=jnp.float32)          # (TM, Cp) f32
    conv_ref[...] = conv.astype(conv_ref.dtype)                 # bf16 store: halves HBM write

    @pl.when(pl.program_id(1) == 0)                             # first M-tile of this core
    def _init():
        sum_ref[...] = jnp.zeros_like(sum_ref)
        ssq_ref[...] = jnp.zeros_like(ssq_ref)

    # Stats accumulate from the f32 MXU result (before the bf16 cast).
    sum_ref[...] += jnp.sum(conv, axis=0, keepdims=True)
    ssq_ref[...] += jnp.sum(conv * conv, axis=0, keepdims=True)


def bn_act_kernel(conv_ref, scale_ref, shift_ref, act_ref):
    """One M-tile: y = conv*scale + shift (folded BN), then LeakyReLU(0.2); bf16 in/out."""
    y = conv_ref[...].astype(jnp.float32) * scale_ref[...] + shift_ref[...]
    act_ref[...] = jnp.where(y >= 0, y, NEG_SLOPE * y).astype(act_ref.dtype)


# ---------------------------------------------------------------------------------------
# Sizing helpers
# ---------------------------------------------------------------------------------------
def _round_up(x, m):
    return (x + m - 1) // m * m


def _vmem_budget():
    """Per-generation VMEM budget (tile sizing) and scoped limit (compiler param)."""
    cap = 64 * 1024 * 1024                    # conservative fallback == v7x per-TC VMEM
    try:
        cap = int(pltpu.get_tpu_info().vmem_capacity_bytes)
    except Exception:
        pass
    budget = int(cap * 0.45)                  # ~29 MiB on v7x, ~57 MiB on v5e/v6e
    limit = min(int(cap * 0.75), 100 * 1024 * 1024)   # 48 MiB on v7x, 96 MiB on v5e/v6e
    return budget, limit


def _pick_tile_m(m_rows, k_pad, c_pad, budget):
    """Largest 128-multiple row tile whose phase-1 VMEM footprint fits `budget`.

    Footprint per grid step (auto-pipelined):
      patches tile : 2 buffers * TM*Kp * 2 B   (bf16)
      conv tile    : 2 buffers * TM*Cp * 2 B   (bf16 output)
      f32 temps    :          ~2 * TM*Cp * 4 B (matmul result + squared values)
      weight       : 2 buffers * Kp*Cp * 2 B   (grid-invariant, counted as fixed cost)
    """
    fixed = 2 * k_pad * c_pad * 2 + (1 << 20)          # weight (x2 buffers) + slack
    per_row = 4 * k_pad + 12 * c_pad
    tm = max(budget - fixed, per_row * 128) // per_row
    tm = max(128, min(2048, (tm // 128) * 128))
    tm = min(tm, _round_up(m_rows, 128))
    return int(tm)


# ---------------------------------------------------------------------------------------
# Forward wrapper
# ---------------------------------------------------------------------------------------
def encoder_block(x, weight, gamma, beta, *, out=False, data_format="NCHW",
                  out_dtype=jnp.float32, lane_align=128):
    """EncoderBlock forward (norm='batch', training mode):
    Conv2d(5x5, stride 2, pad 2, bias=False) -> BatchNorm2d (batch stats) -> LeakyReLU(0.2).

    x: (N, C_in, H, W) NCHW; weight: (C_out, C_in, 5, 5) OIHW.
    data_format="NHWC" skips the final transpose round-trip (cheaper, if the consumer allows).
    lane_align: 128 default; 256 helps on v6e/v7x for large, compute-bound layers.
    """
    N, C_in, H, W = x.shape
    C_out = weight.shape[0]
    KH = KW = 5
    stride, pad = 2, 2
    H_out = (H + 2 * pad - KH) // stride + 1
    W_out = (W + 2 * pad - KW) // stride + 1
    M = N * H_out * W_out
    K = C_in * KH * KW

    Kp = _round_up(K, lane_align)
    Cp = _round_up(C_out, lane_align)
    budget, vmem_limit = _vmem_budget()
    TM = _pick_tile_m(M, Kp, Cp, budget)

    # Split the M axis across TensorCores (leading "parallel" axis; 2 TCs on v7x,
    # harmless sequential iteration on 1-TC v5e/v6e).
    n_tiles = -(-M // TM)
    ncores = 2 if n_tiles >= 2 else 1
    tiles_per_core = -(-n_tiles // ncores)
    Mp = ncores * tiles_per_core * TM

    # --- im2col (glue, plain JAX) in bf16; zero-padded rows/cols contribute exactly 0 ----
    # TODO(synk): build patches in-kernel from a VMEM halo slab to cut phase-1 reads ~6x.
    x_pad = jnp.pad(x.astype(jnp.bfloat16),
                    ((0, 0), (0, 0), (pad, pad), (pad, pad)))
    cols = []
    for kh in range(KH):
        for kw in range(KW):
            cols.append(x_pad[:, :, kh:kh + stride * H_out:stride,
                              kw:kw + stride * W_out:stride])    # (N, Cin, Ho, Wo)
    patches = jnp.stack(cols, axis=2)                            # (N, Cin, 25, Ho, Wo)
    patches = patches.transpose(0, 3, 4, 1, 2).reshape(M, K)     # (M, K) bf16
    patches = jnp.pad(patches, ((0, Mp - M), (0, Kp - K)))       # (Mp, Kp)

    w_mat = weight.reshape(C_out, K).T.astype(jnp.bfloat16)      # (K, C_out)
    w_mat = jnp.pad(w_mat, ((0, Kp - K), (0, Cp - C_out)))       # (Kp, Cp)

    # -------------- Phase 1: conv (MXU) + per-core per-channel sum / sumsq ---------------
    row_map = lambda c, i: (c * tiles_per_core + i, 0)
    conv_p, csum, cssq = pl.pallas_call(
        conv_stats_kernel,
        grid=(ncores, tiles_per_core),
        in_specs=[pl.BlockSpec((TM, Kp), row_map),
                  pl.BlockSpec((Kp, Cp), lambda c, i: (0, 0))],
        out_specs=(pl.BlockSpec((TM, Cp), row_map),
                   pl.BlockSpec((1, Cp), lambda c, i: (0, c)),   # per-core partial stats
                   pl.BlockSpec((1, Cp), lambda c, i: (0, c))),
        out_shape=(jax.ShapeDtypeStruct((Mp, Cp), jnp.bfloat16),
                   jax.ShapeDtypeStruct((1, ncores * Cp), jnp.float32),
                   jax.ShapeDtypeStruct((1, ncores * Cp), jnp.float32)),
        compiler_params=pltpu.CompilerParams(
            dimension_semantics=("parallel", "arbitrary"),
            vmem_limit_bytes=vmem_limit),
    )(patches, w_mat)

    # --- tiny per-channel fold (plain JAX): padded rows/channels are exact zeros, so
    #     dividing by the true M gives correct batch statistics (biased var == BN train) ---
    m_true = jnp.float32(M)
    csum_t = csum.reshape(ncores, Cp).sum(axis=0)[None, :]       # (1, Cp) combine cores
    cssq_t = cssq.reshape(ncores, Cp).sum(axis=0)[None, :]
    mean = csum_t / m_true
    var = jnp.maximum(cssq_t / m_true - mean * mean, 0.0)        # clamp: cancellation guard
    inv_std = jax.lax.rsqrt(var + EPS)
    gamma_p = jnp.pad(gamma.astype(jnp.float32), (0, Cp - C_out)).reshape(1, Cp)
    beta_p = jnp.pad(beta.astype(jnp.float32), (0, Cp - C_out)).reshape(1, Cp)
    scale = gamma_p * inv_std
    shift = beta_p - mean * scale

    # --------------------- Phase 2: folded BatchNorm + LeakyReLU -------------------------
    # TODO(synk): fuse with phase 1 (VMEM-resident conv scratch) when Mp*Cp*2B fits VMEM.
    act_p = pl.pallas_call(
        bn_act_kernel,
        grid=(Mp // TM,),
        in_specs=[pl.BlockSpec((TM, Cp), lambda i: (i, 0)),
                  pl.BlockSpec((1, Cp), lambda i: (0, 0)),
                  pl.BlockSpec((1, Cp), lambda i: (0, 0))],
        out_specs=pl.BlockSpec((TM, Cp), lambda i: (i, 0)),
        out_shape=jax.ShapeDtypeStruct((Mp, Cp), jnp.bfloat16),
        compiler_params=pltpu.CompilerParams(
            dimension_semantics=("parallel",),
            vmem_limit_bytes=vmem_limit),
    )(conv_p, scale, shift)

    def reformat(mat):
        y = mat[:M, :C_out].reshape(N, H_out, W_out, C_out)      # slice to C_out first
        if data_format == "NHWC":
            return y.astype(out_dtype)
        return y.transpose(0, 3, 1, 2).astype(out_dtype)         # NCHW (module parity)

    if out:
        return reformat(act_p), reformat(conv_p)
    return reformat(act_p)


# ---------------------------------------------------------------------------------------
# Pure-JAX (f32) reference of the same forward semantics
# ---------------------------------------------------------------------------------------
def reference(x, weight, gamma, beta):
    conv = jax.lax.conv_general_dilated(
        x, weight, window_strides=(2, 2), padding=((2, 2), (2, 2)),
        dimension_numbers=('NCHW', 'OIHW', 'NCHW'))
    mean = conv.mean(axis=(0, 2, 3), keepdims=True)
    var = ((conv - mean) ** 2).mean(axis=(0, 2, 3), keepdims=True)
    y = (conv - mean) * jax.lax.rsqrt(var + EPS)
    y = y * gamma.reshape(1, -1, 1, 1) + beta.reshape(1, -1, 1, 1)
    act = jnp.where(y >= 0, y, NEG_SLOPE * y)
    return act, conv


if __name__ == "__main__":
    key = jax.random.PRNGKey(0)
    k_x, k_w = jax.random.split(key)

    N, C_in, C_out, H, W = 2, 4, 8, 16, 16
    x = jax.random.normal(k_x, (N, C_in, H, W), dtype=jnp.float32)
    weight = 0.1 * jax.random.normal(k_w, (C_out, C_in, 5, 5), dtype=jnp.float32)
    gamma = 1.0 + 0.1 * jnp.arange(C_out, dtype=jnp.float32)
    beta = 0.05 * jnp.arange(C_out, dtype=jnp.float32)

    act, conv_out = encoder_block(x, weight, gamma, beta, out=True)
    act = jax.block_until_ready(act)
    conv_out = jax.block_until_ready(conv_out)

    act_ref, conv_ref = reference(x, weight, gamma, beta)
    assert act.shape == (N, C_out, H // 2, W // 2)
    assert conv_out.shape == (N, C_out, H // 2, W // 2)
    # bf16 MXU inputs and bf16 conv/act slabs (f32 accumulation + f32 BN stats) vs the
    # f32 reference -> loosened tolerances.
    assert jnp.allclose(conv_out, conv_ref, atol=5e-2, rtol=5e-2)
    assert jnp.allclose(act, act_ref, atol=5e-2, rtol=5e-2)

    print("KERNEL_OK")
</pallas_src>

<mosaic_0001>
module attributes {stable_mosaic.version = 11 : i64} {
  func.func @conv_stats_kernel(%arg0: i32, %arg1: i32, %arg2: memref<128x128xbf16, #tpu.memory_space<vmem>>, %arg3: memref<128x128xbf16, #tpu.memory_space<vmem>>, %arg4: memref<128x128xbf16, #tpu.memory_space<vmem>>, %arg5: memref<1x128xf32, #tpu.memory_space<vmem>>, %arg6: memref<1x128xf32, #tpu.memory_space<vmem>>) attributes {dimension_semantics = [#tpu.dimension_semantics<parallel>, #tpu.dimension_semantics<arbitrary>], iteration_bounds = array<i64: 1, 1>, scalar_prefetch = 0 : i64, scratch_operands = 0 : i64, tpu.core_type = #tpu.core_type<tc>, window_params = [{transform_indices = @transform_0, window_bounds = array<i64: 128, 128>}, {pipeline_mode = #tpu.pipeline_mode<synchronous>, transform_indices = @transform_1, window_bounds = array<i64: 128, 128>}, {transform_indices = @transform_2, window_bounds = array<i64: 128, 128>}, {transform_indices = @transform_3, window_bounds = array<i64: 1, 128>}, {transform_indices = @transform_4, window_bounds = array<i64: 1, 128>}]} {
    %c0 = arith.constant 0 : index
    %c0_0 = arith.constant 0 : index
    %0 = vector.load %arg2[%c0, %c0_0] : memref<128x128xbf16, #tpu.memory_space<vmem>>, vector<128x128xbf16>
    %c0_1 = arith.constant 0 : index
    %c0_2 = arith.constant 0 : index
    %1 = vector.load %arg3[%c0_1, %c0_2] : memref<128x128xbf16, #tpu.memory_space<vmem>>, vector<128x128xbf16>
    %cst = arith.constant dense<0.000000e+00> : vector<128x128xf32>
    %2 = tpu.matmul %0, %1, %cst {dimension_numbers = #tpu.dot_dimension_numbers<[1], [0], [0], [1], [0, 0, 1, 1], [], []>} : vector<128x128xbf16>, vector<128x128xbf16>, vector<128x128xf32> -> vector<128x128xf32>
    %3 = arith.truncf %2 : vector<128x128xf32> to vector<128x128xbf16>
    %c0_3 = arith.constant 0 : index
    %c0_4 = arith.constant 0 : index
    %4 = vector.load %arg4[%c0_3, %c0_4] : memref<128x128xbf16, #tpu.memory_space<vmem>>, vector<128x128xbf16>
    tpu.vector_store %arg4[%c0_3, %c0_4], %3 {strides = array<i32>} : memref<128x128xbf16, #tpu.memory_space<vmem>>, vector<128x128xbf16>,
    %c0_i32 = arith.constant 0 : i32
    %5 = arith.cmpi eq, %arg1, %c0_i32 : i32
    %6 = arith.extui %5 : i1 to i32
    %c0_i32_5 = arith.constant 0 : i32
    %7 = arith.cmpi ne, %6, %c0_i32_5 : i32
    scf.if %7 {
      %cst_16 = arith.constant 0.000000e+00 : f32
      %19 = vector.broadcast %cst_16 : f32 to vector<1x128xf32>
      %c0_17 = arith.constant 0 : index
      %c0_18 = arith.constant 0 : index
      %20 = vector.load %arg5[%c0_17, %c0_18] : memref<1x128xf32, #tpu.memory_space<vmem>>, vector<1x128xf32>
      tpu.vector_store %arg5[%c0_17, %c0_18], %19 {strides = array<i32>} : memref<1x128xf32, #tpu.memory_space<vmem>>, vector<1x128xf32>,
      %cst_19 = arith.constant 0.000000e+00 : f32
      %21 = vector.broadcast %cst_19 : f32 to vector<1x128xf32>
      %c0_20 = arith.constant 0 : index
      %c0_21 = arith.constant 0 : index
      %22 = vector.load %arg6[%c0_20, %c0_21] : memref<1x128xf32, #tpu.memory_space<vmem>>, vector<1x128xf32>
      tpu.vector_store %arg6[%c0_20, %c0_21], %21 {strides = array<i32>} : memref<1x128xf32, #tpu.memory_space<vmem>>, vector<1x128xf32>,
    } else {
    }
    %c0_6 = arith.constant 0 : index
    %c0_7 = arith.constant 0 : index
    %8 = vector.load %arg5[%c0_6, %c0_7] : memref<1x128xf32, #tpu.memory_space<vmem>>, vector<1x128xf32>
    %cst_8 = arith.constant dense<0.000000e+00> : vector<128xf32>
    %9 = vector.multi_reduction <add>, %2, %cst_8 [0] : vector<128x128xf32> to vector<128xf32>
    %10 = vector.shape_cast %9 : vector<128xf32> to vector<1x128xf32>
    %11 = arith.addf %8, %10 : vector<1x128xf32>
    %c0_9 = arith.constant 0 : index
    %c0_10 = arith.constant 0 : index
    %12 = vector.load %arg5[%c0_9, %c0_10] : memref<1x128xf32, #tpu.memory_space<vmem>>, vector<1x128xf32>
    tpu.vector_store %arg5[%c0_9, %c0_10], %11 {strides = array<i32>} : memref<1x128xf32, #tpu.memory_space<vmem>>, vector<1x128xf32>,
    %c0_11 = arith.constant 0 : index
    %c0_12 = arith.constant 0 : index
    %13 = vector.load %arg6[%c0_11, %c0_12] : memref<1x128xf32, #tpu.memory_space<vmem>>, vector<1x128xf32>
    %14 = arith.mulf %2, %2 : vector<128x128xf32>
    %cst_13 = arith.constant dense<0.000000e+00> : vector<128xf32>
    %15 = vector.multi_reduction <add>, %14, %cst_13 [0] : vector<128x128xf32> to vector<128xf32>
    %16 = vector.shape_cast %15 : vector<128xf32> to vector<1x128xf32>
    %17 = arith.addf %13, %16 : vector<1x128xf32>
    %c0_14 = arith.constant 0 : index
    %c0_15 = arith.constant 0 : index
    %18 = vector.load %arg6[%c0_14, %c0_15] : memref<1x128xf32, #tpu.memory_space<vmem>>, vector<1x128xf32>
    tpu.vector_store %arg6[%c0_14, %c0_15], %17 {strides = array<i32>} : memref<1x128xf32, #tpu.memory_space<vmem>>, vector<1x128xf32>,
    return
  }
  func.func @transform_0(%arg0: i32, %arg1: i32) -> (i32, i32) {
    %c1_i32 = arith.constant 1 : i32
    %0 = arith.muli %arg0, %c1_i32 : i32
    %1 = arith.addi %0, %arg1 : i32
    %c0_i32 = arith.constant 0 : i32
    %c0_i32_0 = arith.constant 0 : i32
    return %1, %c0_i32 : i32, i32
  }
  func.func @transform_1(%arg0: i32, %arg1: i32) -> (i32, i32) {
    %c0_i32 = arith.constant 0 : i32
    %c0_i32_0 = arith.constant 0 : i32
    %c0_i32_1 = arith.constant 0 : i32
    return %c0_i32, %c0_i32_0 : i32, i32
  }
  func.func @transform_2(%arg0: i32, %arg1: i32) -> (i32, i32) {
    %c1_i32 = arith.constant 1 : i32
    %0 = arith.muli %arg0, %c1_i32 : i32
    %1 = arith.addi %0, %arg1 : i32
    %c0_i32 = arith.constant 0 : i32
    %c0_i32_0 = arith.constant 0 : i32
    return %1, %c0_i32 : i32, i32
  }
  func.func @transform_3(%arg0: i32, %arg1: i32) -> (i32, i32) {
    %c0_i32 = arith.constant 0 : i32
    %c0_i32_0 = arith.constant 0 : i32
    return %c0_i32, %arg0 : i32, i32
  }
  func.func @transform_4(%arg0: i32, %arg1: i32) -> (i32, i32) {
    %c0_i32 = arith.constant 0 : i32
    %c0_i32_0 = arith.constant 0 : i32
    return %c0_i32, %arg0 : i32, i32
  }
}

</mosaic_0001>

<llo_original>
// kernel: tpu_custom_call.1
$region0: #{tpu_custom_call.1}
  #allocation0 [shape = 'u32[]', space=smem, size = 0x4, offset = 0x4, fixed_abs, tag = 'smem constant byte address 0x4 - core index']
  #allocation1 [shape = 'u32[72,128]{1,0:T(1,128)}', space=vmem, size = 0x9000, scoped, tag = 'internal scratch']
  %s0 = inlined_call_operand.hbm [shape: bf16[128,128], index: 0, kind: input, shape index: {}]
  %s1 = inlined_call_operand.hbm [shape: bf16[128,128], index: 1, kind: input, shape index: {}]
  %s2 = inlined_call_operand.hbm [shape: bf16[128,128], index: 2, kind: output, shape index: {0}]
  %s3 = inlined_call_operand.hbm [shape: f32[1,128], index: 3, kind: output, shape index: {1}]
  %s4 = inlined_call_operand.hbm [shape: f32[1,128], index: 4, kind: output, shape index: {2}]
  %5 = xla_tuple %s2, %s3, %s4
  %s6 = sld [smem:[#allocation0]]
  $region46: #{tpu_custom_call.1} parent=0
    _
  %s8 = ssub.s32 1, %s6
  %s9 = scalar_select 0, %s8, %s6
  $region1: #{tpu_custom_call.1} parent=0
    #allocation2 [shape = 'u8[32768]{0}', space=vmem, size = 0x8000, scoped, tag = 'input window, operand 0, single buffered']
    #allocation3 [shape = 's32[1]{0}', space=sflag, size = 0x4, scoped, tag = 'scoped memory for tpu_custom_call.1']
    #allocation4 [shape = 's32[1]{0}', space=sflag, size = 0x4, scoped, tag = 'scoped memory for tpu_custom_call.1']
    #allocation5 [shape = 'u8[32768]{0}', space=vmem, size = 0x8000, scoped, tag = 'input window, operand 1, single buffered']
    #allocation6 [shape = 's32[1]{0}', space=sflag, size = 0x4, scoped, tag = 'scoped memory for tpu_custom_call.1']
    #allocation7 [shape = 'u8[32768]{0}', space=vmem, size = 0x8000, scoped, tag = 'output window, operand 0, single buffered']
    #allocation8 [shape = 'u8[512]{0}', space=vmem, size = 0x400, scoped, tag = 'output window, operand 1, single buffered']
    #allocation9 [shape = 's32[1]{0}', space=sflag, size = 0x4, scoped, tag = 'scoped memory for tpu_custom_call.1']
    #allocation10 [shape = 'u8[512]{0}', space=vmem, size = 0x400, scoped, tag = 'output window, operand 2, single buffered']
    %10 = vsyncpa [#allocation3], 0
    %11 = vsyncpa [#allocation6], 0
    %12 = vsyncpa [#allocation4], 0
    %13 = vsyncpa [#allocation9], 0
    // Predicated region
    $region2: #{tpu_custom_call.1} parent=1 // pred_check
      _
    $region3: #{tpu_custom_call.1} parent=1 // pred_check_branch
      %15 = sbr.rel (0) target = $region5
    $region4: #{tpu_custom_call.1} parent=1 // pred_region
      %s16 = sadd.s32 0, 0
      %s17 = smul.u32 16, %s16
      %19 = vsyncadd [#allocation3], 0
      %s20 = smul.addr %s17, 4
      %s21 = scalar_lea.hbm %s0, %s20
      %s22 = sshll.u32 %s21, 4
      %s23 = int_to_ptr.hbm [resolvable:$true] %s22
      %s24 = sshll.u32 [#allocation2], 4
      %s25 = int_to_ptr.vmem [resolvable:$true] %s24
      %30 = dma.hbm_to_vmem [thread:$0]  %s23, 1024, %s25, [#allocation3], 64, 64, 4
    $region5: #{tpu_custom_call.1} parent=1 // pred_fallthru
      _
    // Predicated region
    $region6: #{tpu_custom_call.1} parent=1 // pred_check
      _
    $region7: #{tpu_custom_call.1} parent=1 // pred_check_branch
      %32 = sbr.rel (0) target = $region9
    $region8: #{tpu_custom_call.1} parent=1 // pred_region
      %34 = vsyncadd [#allocation6], 0
      %s35 = sshll.u32 %s1, 4
      %s36 = int_to_ptr.hbm [resolvable:$true] %s35
      %s37 = sshll.u32 [#allocation5], 4
      %s38 = int_to_ptr.vmem [resolvable:$true] %s37
      %43 = dma.hbm_to_vmem [thread:$0]  %s36, 1024, %s38, [#allocation6], 64, 64, 4
    $region9: #{tpu_custom_call.1} parent=1 // pred_fallthru
      _
    // Predicated region
    $region10: #{tpu_custom_call.1} parent=1 // pred_check
      _
    $region11: #{tpu_custom_call.1} parent=1 // pred_check_branch
      %45 = sbr.rel (0) target = $region13
    $region12: #{tpu_custom_call.1} parent=1 // pred_region
      %47 = dma.done [#allocation3], 1024
    $region13: #{tpu_custom_call.1} parent=1 // pred_fallthru
      _
    // Predicated region
    $region14: #{tpu_custom_call.1} parent=1 // pred_check
      _
    $region15: #{tpu_custom_call.1} parent=1 // pred_check_branch
      %49 = sbr.rel (0) target = $region17
    $region16: #{tpu_custom_call.1} parent=1 // pred_region
      %51 = dma.done [#allocation6], 1024
    $region17: #{tpu_custom_call.1} parent=1 // pred_fallthru
      _
    %s52 = sadd.s32 0, 0
    %s53 = smul.u32 16, %s52
    %s54 = sadd.s32 0, 0
    %s55 = smul.u32 16, %s54
    %v56 = vld [vmem:[#allocation2] sm:$0xf]
    %v57 = vld [vmem:[#allocation2 + $0x4] sm:$0xf]
    %v58 = vld [vmem:[#allocation2 + $0x8] sm:$0xf]
    %v59 = vld [vmem:[#allocation2 + $0xc] sm:$0xf]
    %v60 = vld [vmem:[#allocation2 + $0x10] sm:$0xf]
    %v61 = vld [vmem:[#allocation2 + $0x14] sm:$0xf]
    %v62 = vld [vmem:[#allocation2 + $0x18] sm:$0xf]
    %v63 = vld [vmem:[#allocation2 + $0x1c] sm:$0xf]
    %v64 = vld [vmem:[#allocation2 + $0x20] sm:$0xf]
    %v65 = vld [vmem:[#allocation2 + $0x24] sm:$0xf]
    %v66 = vld [vmem:[#allocation2 + $0x28] sm:$0xf]
    %v67 = vld [vmem:[#allocation2 + $0x2c] sm:$0xf]
    %v68 = vld [vmem:[#allocation2 + $0x30] sm:$0xf]
    %v69 = vld [vmem:[#allocation2 + $0x34] sm:$0xf]
    %v70 = vld [vmem:[#allocation2 + $0x38] sm:$0xf]
    %v71 = vld [vmem:[#allocation2 + $0x3c] sm:$0xf]
    %v72 = vld [vmem:[#allocation5] sm:$0xf]
    %v73 = vld [vmem:[#allocation5 + $0x4] sm:$0xf]
    %v74 = vld [vmem:[#allocation5 + $0x8] sm:$0xf]
    %v75 = vld [vmem:[#allocation5 + $0xc] sm:$0xf]
    %v76 = vld [vmem:[#allocation5 + $0x10] sm:$0xf]
    %v77 = vld [vmem:[#allocation5 + $0x14] sm:$0xf]
    %v78 = vld [vmem:[#allocation5 + $0x18] sm:$0xf]
    %v79 = vld [vmem:[#allocation5 + $0x1c] sm:$0xf]
    %v80 = vld [vmem:[#allocation5 + $0x20] sm:$0xf]
    %v81 = vld [vmem:[#allocation5 + $0x24] sm:$0xf]
    %v82 = vld [vmem:[#allocation5 + $0x28] sm:$0xf]
    %v83 = vld [vmem:[#allocation5 + $0x2c] sm:$0xf]
    %v84 = vld [vmem:[#allocation5 + $0x30] sm:$0xf]
    %v85 = vld [vmem:[#allocation5 + $0x34] sm:$0xf]
    %v86 = vld [vmem:[#allocation5 + $0x38] sm:$0xf]
    %v87 = vld [vmem:[#allocation5 + $0x3c] sm:$0xf]
    %v104 = vunpack.c.l.b16 %v56
    %v105 = vunpack.c.l.b16 %v57
    %v106 = vunpack.c.l.b16 %v58
    %v107 = vunpack.c.l.b16 %v59
    %v108 = vunpack.c.l.b16 %v60
    %v109 = vunpack.c.l.b16 %v61
    %v110 = vunpack.c.l.b16 %v62
    %v111 = vunpack.c.l.b16 %v63
    %v112 = vunpack.c.l.b16 %v64
    %v113 = vunpack.c.l.b16 %v65
    %v114 = vunpack.c.l.b16 %v66
    %v115 = vunpack.c.l.b16 %v67
    %v116 = vunpack.c.l.b16 %v68
    %v117 = vunpack.c.l.b16 %v69
    %v118 = vunpack.c.l.b16 %v70
    %v119 = vunpack.c.l.b16 %v71
    %v120 = vpack.c.b16 %v105, %v104
    %v121 = vpack.c.b16 %v107, %v106
    %v122 = vpack.c.b16 %v109, %v108
    %v123 = vpack.c.b16 %v111, %v110
    %v124 = vpack.c.b16 %v113, %v112
    %v125 = vpack.c.b16 %v115, %v114
    %v126 = vpack.c.b16 %v117, %v116
    %v127 = vpack.c.b16 %v119, %v118
    %v152 = vunpack.c.l.b16 %v72
    %v153 = vunpack.c.l.b16 %v73
    %v154 = vunpack.c.l.b16 %v74
    %v155 = vunpack.c.l.b16 %v75
    %v156 = vunpack.c.l.b16 %v76
    %v157 = vunpack.c.l.b16 %v77
    %v158 = vunpack.c.l.b16 %v78
    %v159 = vunpack.c.l.b16 %v79
    %v160 = vunpack.c.l.b16 %v80
    %v161 = vunpack.c.l.b16 %v81
    %v162 = vunpack.c.l.b16 %v82
    %v163 = vunpack.c.l.b16 %v83
    %v164 = vunpack.c.l.b16 %v84
    %v165 = vunpack.c.l.b16 %v85
    %v166 = vunpack.c.l.b16 %v86
    %v167 = vunpack.c.l.b16 %v87
    %v168 = vpack.c.b16 %v153, %v152
    %v169 = vpack.c.b16 %v155, %v154
    %v170 = vpack.c.b16 %v157, %v156
    %v171 = vpack.c.b16 %v159, %v158
    %v172 = vpack.c.b16 %v161, %v160
    %v173 = vpack.c.b16 %v163, %v162
    %v174 = vpack.c.b16 %v165, %v164
    %v175 = vpack.c.b16 %v167, %v166
    %184 = vmatpush.bf16.msra.mxu0 %v175
    %185 = vmatpush.bf16.msra.mxu0 %v174
    %186 = vmatpush.bf16.msra.mxu0 %v173
    %187 = vmatpush.bf16.msra.mxu0 %v172
    %188 = vmatpush.bf16.msra.mxu0 %v171
    %189 = vmatpush.bf16.msra.mxu0 %v170
    %190 = vmatpush.bf16.msra.mxu0 %v169
    %191 = vmatpush.bf16.msra.mxu0 %v168
    %192 = vmatmul.bf16.gmra.mxu0 %v120
    %v193 = vpop.f32.mrf.mxu0
    %v194 = vadd.f32 0.0, %v193
    %v195 = vpop.f32.mrf.mxu0
    %v196 = vadd.f32 0.0, %v195
    %197 = vmatmul.bf16.gmra.mxu0 %v121
    %v198 = vpop.f32.mrf.mxu0
    %v199 = vadd.f32 0.0, %v198
    %v200 = vpop.f32.mrf.mxu0
    %v201 = vadd.f32 0.0, %v200
    %202 = vmatmul.bf16.gmra.mxu0 %v122
    %v203 = vpop.f32.mrf.mxu0
    %v204 = vadd.f32 0.0, %v203
    %v205 = vpop.f32.mrf.mxu0
    %v206 = vadd.f32 0.0, %v205
    %207 = vmatmul.bf16.gmra.mxu0 %v123
    %v208 = vpop.f32.mrf.mxu0
    %v209 = vadd.f32 0.0, %v208
    %v210 = vpop.f32.mrf.mxu0
    %v211 = vadd.f32 0.0, %v210
    %212 = vmatmul.bf16.gmra.mxu0 %v124
    %v213 = vpop.f32.mrf.mxu0
    %v214 = vadd.f32 0.0, %v213
    %v215 = vpop.f32.mrf.mxu0
    %v216 = vadd.f32 0.0, %v215
    %217 = vmatmul.bf16.gmra.mxu0 %v125
    %v218 = vpop.f32.mrf.mxu0
    %v219 = vadd.f32 0.0, %v218
    %v220 = vpop.f32.mrf.mxu0
    %v221 = vadd.f32 0.0, %v220
    %222 = vmatmul.bf16.gmra.mxu0 %v126
    %v223 = vpop.f32.mrf.mxu0
    %v224 = vadd.f32 0.0, %v223
    %v225 = vpop.f32.mrf.mxu0
    %v226 = vadd.f32 0.0, %v225
    %227 = vmatmul.bf16.gmra.mxu0 %v127
    %v228 = vpop.f32.mrf.mxu0
    %v229 = vadd.f32 0.0, %v228
    %v230 = vpop.f32.mrf.mxu0
    %v231 = vadd.f32 0.0, %v230
    %232 = vdwg.mxu0
    %v233 = vpack.c.bf16 %v194, %v194
    %v234 = vpack.c.bf16 %v196, %v196
    %v235 = vpack.c.bf16 %v199, %v199
    %v236 = vpack.c.bf16 %v201, %v201
    %v237 = vpack.c.bf16 %v204, %v204
    %v238 = vpack.c.bf16 %v206, %v206
    %v239 = vpack.c.bf16 %v209, %v209
    %v240 = vpack.c.bf16 %v211, %v211
    %v241 = vpack.c.bf16 %v214, %v214
    %v242 = vpack.c.bf16 %v216, %v216
    %v243 = vpack.c.bf16 %v219, %v219
    %v244 = vpack.c.bf16 %v221, %v221
    %v245 = vpack.c.bf16 %v224, %v224
    %v246 = vpack.c.bf16 %v226, %v226
    %v247 = vpack.c.bf16 %v229, %v229
    %v248 = vpack.c.bf16 %v231, %v231
    %249 = vst [vmem:[#allocation7] sm:$0xf] %v233
    %250 = vst [vmem:[#allocation7 + $0x4] sm:$0xf] %v234
    %251 = vst [vmem:[#allocation7 + $0x8] sm:$0xf] %v235
    %252 = vst [vmem:[#allocation7 + $0xc] sm:$0xf] %v236
    %253 = vst [vmem:[#allocation7 + $0x10] sm:$0xf] %v237
    %254 = vst [vmem:[#allocation7 + $0x14] sm:$0xf] %v238
    %255 = vst [vmem:[#allocation7 + $0x18] sm:$0xf] %v239
    %256 = vst [vmem:[#allocation7 + $0x1c] sm:$0xf] %v240
    %257 = vst [vmem:[#allocation7 + $0x20] sm:$0xf] %v241
    %258 = vst [vmem:[#allocation7 + $0x24] sm:$0xf] %v242
    %259 = vst [vmem:[#allocation7 + $0x28] sm:$0xf] %v243
    %260 = vst [vmem:[#allocation7 + $0x2c] sm:$0xf] %v244
    %261 = vst [vmem:[#allocation7 + $0x30] sm:$0xf] %v245
    %262 = vst [vmem:[#allocation7 + $0x34] sm:$0xf] %v246
    %263 = vst [vmem:[#allocation7 + $0x38] sm:$0xf] %v247
    %264 = vst [vmem:[#allocation7 + $0x3c] sm:$0xf] %v248
    %p265 = scmp.eq.s32.totalorder 0, 0
    // Predicated region
    $region18: #{tpu_custom_call.1} parent=1 // pred_check
      %p266 = pneg %p265
    $region19: #{tpu_custom_call.1} parent=1 // pred_check_branch
      %268 = sbr.rel (%p266) target = $region21
    $region20: #{tpu_custom_call.1} parent=1 // pred_region
      %269 = vst [vmem:[#allocation8] sm:$0x1] 0.0
      %270 = vst [vmem:[#allocation10] sm:$0x1] 0.0
    $region21: #{tpu_custom_call.1} parent=1 // pred_fallthru
      _
    %v271 = vld [vmem:[#allocation8] sm:$0x1]
    %v272 = vadd.f32 %v194, %v196
    %v273 = vadd.f32 %v272, %v199
    %v274 = vadd.f32 %v273, %v201
    %v275 = vadd.f32 %v274, %v204
    %v276 = vadd.f32 %v275, %v206
    %v277 = vadd.f32 %v276, %v209
    %v278 = vadd.f32 %v277, %v211
    %v279 = vadd.f32 %v278, %v214
    %v280 = vadd.f32 %v279, %v216
    %v281 = vadd.f32 %v280, %v219
    %v282 = vadd.f32 %v281, %v221
    %v283 = vadd.f32 %v282, %v224
    %v284 = vadd.f32 %v283, %v226
    %v285 = vadd.f32 %v284, %v229
    %v286 = vadd.f32 %v285, %v231
    %v287 = vrot.slane %v286, 4
    %v288 = vadd.f32 %v286, %v287
    %v289 = vrot.slane %v288, 2
    %v290 = vadd.f32 %v288, %v289
    %v291 = vrot.slane %v290, 1
    %v292 = vadd.f32 %v290, %v291
    %v293 = vadd.f32 %v271, %v292
    %294 = vst [vmem:[#allocation8] sm:$0x1] %v293
    %v295 = vld [vmem:[#allocation10] sm:$0x1]
    %v296 = vmul.f32 %v194, %v194
    %v297 = vmul.f32 %v196, %v196
    %v298 = vmul.f32 %v199, %v199
    %v299 = vmul.f32 %v201, %v201
    %v300 = vmul.f32 %v204, %v204
    %v301 = vmul.f32 %v206, %v206
    %v302 = vmul.f32 %v209, %v209
    %v303 = vmul.f32 %v211, %v211
    %v304 = vmul.f32 %v214, %v214
    %v305 = vmul.f32 %v216, %v216
    %v306 = vmul.f32 %v219, %v219
    %v307 = vmul.f32 %v221, %v221
    %v308 = vmul.f32 %v224, %v224
    %v309 = vmul.f32 %v226, %v226
    %v310 = vmul.f32 %v229, %v229
    %v311 = vmul.f32 %v231, %v231
    %v312 = vadd.f32 %v296, %v297
    %v313 = vadd.f32 %v312, %v298
    %v314 = vadd.f32 %v313, %v299
    %v315 = vadd.f32 %v314, %v300
    %v316 = vadd.f32 %v315, %v301
    %v317 = vadd.f32 %v316, %v302
    %v318 = vadd.f32 %v317, %v303
    %v319 = vadd.f32 %v318, %v304
    %v320 = vadd.f32 %v319, %v305
    %v321 = vadd.f32 %v320, %v306
    %v322 = vadd.f32 %v321, %v307
    %v323 = vadd.f32 %v322, %v308
    %v324 = vadd.f32 %v323, %v309
    %v325 = vadd.f32 %v324, %v310
    %v326 = vadd.f32 %v325, %v311
    %v327 = vrot.slane %v326, 4
    %v328 = vadd.f32 %v326, %v327
    %v329 = vrot.slane %v328, 2
    %v330 = vadd.f32 %v328, %v329
    %v331 = vrot.slane %v330, 1
    %v332 = vadd.f32 %v330, %v331
    %v333 = vadd.f32 %v295, %v332
    %334 = vst [vmem:[#allocation10] sm:$0x1] %v333
    // Predicated region
    $region22: #{tpu_custom_call.1} parent=1 // pred_check
      _
    $region23: #{tpu_custom_call.1} parent=1 // pred_check_branch
      %336 = sbr.rel (0) target = $region25
    $region24: #{tpu_custom_call.1} parent=1 // pred_region
      %s337 = sadd.s32 0, 0
      %s338 = smul.u32 16, %s337
      %340 = vsyncadd [#allocation4], 0
      %s341 = smul.addr %s338, 4
      %s342 = scalar_lea.hbm %s2, %s341
      %s343 = sshll.u32 [#allocation7], 4
      %s344 = int_to_ptr.vmem [resolvable:$true] %s343
      %s345 = sshll.u32 %s342, 4
      %s346 = int_to_ptr.hbm [resolvable:$true] %s345
      %351 = dma.vmem_to_hbm [thread:$0]  %s344, 1024, %s346, [#allocation4], 64, 64, 4
    $region25: #{tpu_custom_call.1} parent=1 // pred_fallthru
      _
    // Predicated region
    $region26: #{tpu_custom_call.1} parent=1 // pred_check
      _
    $region27: #{tpu_custom_call.1} parent=1 // pred_check_branch
      %353 = sbr.rel (0) target = $region29
    $region28: #{tpu_custom_call.1} parent=1 // pred_region
      %355 = vsyncadd [#allocation9], 0
      %s357 = sshll.u32 [#allocation8], 4
      %s358 = int_to_ptr.vmem [resolvable:$true] %s357
      %s359 = sshll.u32 %s3, 4
      %s360 = int_to_ptr.hbm [resolvable:$true] %s359
      %362 = dma.vmem_to_hbm [thread:$0]  %s358, 16, %s360, [#allocation9]
    $region29: #{tpu_custom_call.1} parent=1 // pred_fallthru
      _
    // Predicated region
    $region30: #{tpu_custom_call.1} parent=1 // pred_check
      _
    $region31: #{tpu_custom_call.1} parent=1 // pred_check_branch
      %364 = sbr.rel (0) target = $region33
    $region32: #{tpu_custom_call.1} parent=1 // pred_region
      %366 = vsyncadd [#allocation9], 0
      %s368 = sshll.u32 [#allocation10], 4
      %s369 = int_to_ptr.vmem [resolvable:$true] %s368
      %s370 = sshll.u32 %s4, 4
      %s371 = int_to_ptr.hbm [resolvable:$true] %s370
      %373 = dma.vmem_to_hbm [thread:$0]  %s369, 16, %s371, [#allocation9]
    $region33: #{tpu_custom_call.1} parent=1 // pred_fallthru
      _
    // Predicated region
    $region34: #{tpu_custom_call.1} parent=1 // pred_check
      _
    $region35: #{tpu_custom_call.1} parent=1 // pred_check_branch
      %375 = sbr.rel (0) target = $region37
    $region36: #{tpu_custom_call.1} parent=1 // pred_region
      %377 = dma.done [#allocation4], 1024
    $region37: #{tpu_custom_call.1} parent=1 // pred_fallthru
      _
    // Predicated region
    $region38: #{tpu_custom_call.1} parent=1 // pred_check
      _
    $region39: #{tpu_custom_call.1} parent=1 // pred_check_branch
      %379 = sbr.rel (0) target = $region41
    $region40: #{tpu_custom_call.1} parent=1 // pred_region
      %381 = dma.done [#allocation9], 16
    $region41: #{tpu_custom_call.1} parent=1 // pred_fallthru
      _
    // Predicated region
    $region42: #{tpu_custom_call.1} parent=1 // pred_check
      _
    $region43: #{tpu_custom_call.1} parent=1 // pred_check_branch
      %383 = sbr.rel (0) target = $region45
    $region44: #{tpu_custom_call.1} parent=1 // pred_region
      %385 = dma.done [#allocation9], 16
    $region45: #{tpu_custom_call.1} parent=1 // pred_fallthru
      _
    %386 = vsyncpa [#allocation3], 1
    %387 = vsyncpa [#allocation6], 1
    %388 = vsyncpa [#allocation4], 1
    %389 = vsyncpa [#allocation9], 1

</llo_original>
